<compile_context>
chip_gen: v6e
topology: v6e:2x2x1
jax: 0.10.0
libtpu: 0.0.40
codegen_flags: <defaults>
</compile_context>

<pallas_src>
import jax
import jax.numpy as jnp
from jax import lax
from jax.experimental import pallas as pl
from jax.experimental.pallas import tpu as pltpu


def _round_up(n, m):
    return (n + m - 1) // m * m


def _pick_tile(dim, align, max_tile):
    """Largest tile <= max_tile (multiple of `align`) that evenly tiles the
    `align`-padded dimension.  Returns (tile, padded_dim)."""
    padded = _round_up(dim, align)
    tile = min(max_tile, padded)
    while padded % tile:
        tile -= align
    return tile, padded


def _pad2d(a, shape):
    if a.shape == shape:
        return a
    return jnp.zeros(shape, a.dtype).at[: a.shape[0], : a.shape[1]].set(a)


def _linear_kernel(x_ref, w_ref, b_ref, o_ref, acc_ref):
    """One (i, j, k) grid step of  out[i, j] += x[i, k] @ w[j, k]^T.

    x_ref:   (tm, tk)  bf16 (MXU input)
    w_ref:   (tn, tk)  bf16, PyTorch (O, F) layout -> contract over axis 1
    b_ref:   (1,  tn)  f32
    o_ref:   (tm, tn)  output dtype
    acc_ref: (tm, tn)  f32 scratch accumulator, resident across the K axis
    """
    k = pl.program_id(2)

    @pl.when(k == 0)
    def _():
        acc_ref[...] = jnp.zeros_like(acc_ref)

    # Contract x's F axis (1) with w's F axis (1): (tm, tk) x (tn, tk) -> (tm, tn).
    acc_ref[...] += lax.dot_general(
        x_ref[...],
        w_ref[...],
        dimension_numbers=(((1,), (1,)), ((), ())),
        preferred_element_type=jnp.float32,
    )

    @pl.when(k == pl.num_programs(2) - 1)
    def _():
        o_ref[...] = (acc_ref[...] + b_ref[...]).astype(o_ref.dtype)


def proto_linear(x, weight, bias, *, mxu_dtype=jnp.bfloat16,
                 tm_max=256, tn_max=256, tk_max=512):
    """Forward of Proto_Linear.

    x:      (B, ...)  -> flattened to (B, F) like nn.Flatten()
    weight: (O, F)    (PyTorch nn.Linear convention, NOT pre-transposed)
    bias:   (O,)
    returns (B, O) in x's dtype.

    Tile maxima default to v6e-friendly values (256/256/512).  For v5e keep
    them at 128-multiples (they are); for v7x the computed vmem_limit keeps
    the double-buffered working set inside the 64 MiB budget.
    """
    B = x.shape[0]
    x2d = x.reshape(B, -1)                  # nn.Flatten()
    F = x2d.shape[1]
    O, Fw = weight.shape
    assert Fw == F, (Fw, F)
    out_dtype = x2d.dtype

    # ---- lane/sublane aligned tiles + padded problem sizes -------------------
    tm, Mp = _pick_tile(B, 8, tm_max)       # sublane-aligned rows
    tn, Np = _pick_tile(O, 128, tn_max)     # lane-dense output columns
    tk, Kp = _pick_tile(F, 128, tk_max)     # lane-dense contraction

    # ---- pad + cast inputs (zero-padding F is mathematically inert) ----------
    xp = _pad2d(x2d.astype(mxu_dtype), (Mp, Kp))
    wp = _pad2d(weight.astype(mxu_dtype), (Np, Kp))
    if O == Np:
        bp = bias.astype(jnp.float32).reshape(1, Np)
    else:
        bp = jnp.zeros((1, Np), jnp.float32).at[0, :O].set(bias.astype(jnp.float32))

    grid = (Mp // tm, Np // tn, Kp // tk)

    # ---- VMEM budget / cost hints --------------------------------------------
    in_isz = jnp.dtype(mxu_dtype).itemsize
    out_isz = jnp.dtype(out_dtype).itemsize
    vmem_bytes = (
        2 * (tm * tk + tn * tk) * in_isz    # double-buffered x / w tiles
        + 2 * tn * 4                        # double-buffered bias tile (f32)
        + 2 * tm * tn * out_isz             # double-buffered output tile
        + tm * tn * 4                       # f32 accumulator scratch
    )
    vmem_limit = int(min(100 * 1024 * 1024, max(16 * 1024 * 1024, 2 * vmem_bytes)))

    cost = pl.CostEstimate(
        flops=2 * Mp * Np * Kp,
        transcendentals=0,
        bytes_accessed=(xp.size * in_isz + wp.size * in_isz
                        + bp.size * 4 + Mp * Np * out_isz),
    )

    out_padded = pl.pallas_call(
        _linear_kernel,
        out_shape=jax.ShapeDtypeStruct((Mp, Np), out_dtype),
        grid_spec=pltpu.PrefetchScalarGridSpec(
            num_scalar_prefetch=0,
            grid=grid,
            in_specs=[
                pl.BlockSpec((tm, tk), lambda i, j, k: (i, k)),   # x tile
                pl.BlockSpec((tn, tk), lambda i, j, k: (j, k)),   # w tile (O, F)
                pl.BlockSpec((1, tn), lambda i, j, k: (0, j)),    # bias tile
            ],
            out_specs=pl.BlockSpec((tm, tn), lambda i, j, k: (i, j)),
            scratch_shapes=[pltpu.VMEM((tm, tn), jnp.float32)],
        ),
        compiler_params=pltpu.CompilerParams(
            dimension_semantics=("parallel", "parallel", "arbitrary"),
            vmem_limit_bytes=vmem_limit,
        ),
        cost_estimate=cost,
    )(xp, wp, bp)

    # Slice away alignment padding.
    return out_padded[:B, :O]


if __name__ == "__main__":
    # Small shapes consistent with the module: x = (batch=16, C=4, H=8, W=8)
    # -> in_features = 4*8*8 = 256, out_features = 64.
    key = jax.random.PRNGKey(0)
    kx, kw, kb = jax.random.split(key, 3)

    batch, C, H, W = 16, 4, 8, 8
    in_features = C * H * W
    out_features = 64

    x = jax.random.normal(kx, (batch, C, H, W), dtype=jnp.float32)
    bound = 1.0 / (in_features ** 0.5)
    weight = jax.random.uniform(kw, (out_features, in_features),
                                minval=-bound, maxval=bound, dtype=jnp.float32)
    bias = jax.random.uniform(kb, (out_features,),
                              minval=-bound, maxval=bound, dtype=jnp.float32)

    # tk_max=128 here forces a 2-step K grid even at this small shape, so the
    # pl.when accumulator init/finalize path is actually exercised.
    out = proto_linear(x, weight, bias, tk_max=128)
    jax.block_until_ready(out)
    assert out.shape == (batch, out_features)

    # Reference 1: same bf16-input / f32-accumulate semantics as the kernel.
    xb = x.reshape(batch, -1).astype(jnp.bfloat16).astype(jnp.float32)
    wb = weight.astype(jnp.bfloat16).astype(jnp.float32)
    ref_bf16 = xb @ wb.T + bias
    assert jnp.allclose(out, ref_bf16, atol=1e-4, rtol=1e-4)

    # Reference 2: full-f32 torch semantics (loose tolerance for the bf16 cast).
    ref_f32 = x.reshape(batch, -1) @ weight.T + bias
    assert jnp.allclose(out, ref_f32, atol=5e-2, rtol=5e-2)

    print("KERNEL_OK")
</pallas_src>

<mosaic_0001>
module attributes {stable_mosaic.version = 11 : i64} {
  func.func @_linear_kernel(%arg0: i32, %arg1: i32, %arg2: i32, %arg3: memref<16x128xbf16, #tpu.memory_space<vmem>>, %arg4: memref<128x128xbf16, #tpu.memory_space<vmem>>, %arg5: memref<1x128xf32, #tpu.memory_space<vmem>>, %arg6: memref<16x128xf32, #tpu.memory_space<vmem>>, %arg7: memref<16x128xf32, #tpu.memory_space<vmem>>) attributes {dimension_semantics = [#tpu.dimension_semantics<parallel>, #tpu.dimension_semantics<parallel>, #tpu.dimension_semantics<arbitrary>], iteration_bounds = array<i64: 1, 1, 2>, scalar_prefetch = 0 : i64, scratch_operands = 1 : i64, tpu.core_type = #tpu.core_type<tc>, window_params = [{transform_indices = @transform_0, window_bounds = array<i64: 16, 128>}, {transform_indices = @transform_1, window_bounds = array<i64: 128, 128>}, {transform_indices = @transform_2, window_bounds = array<i64: 1, 128>}, {transform_indices = @transform_3, window_bounds = array<i64: 16, 128>}]} {
    %c0_i32 = arith.constant 0 : i32
    %0 = arith.cmpi eq, %arg2, %c0_i32 : i32
    %1 = arith.extui %0 : i1 to i32
    %c0_i32_0 = arith.constant 0 : i32
    %2 = arith.cmpi ne, %1, %c0_i32_0 : i32
    scf.if %2 {
      %cst_9 = arith.constant 0.000000e+00 : f32
      %12 = vector.broadcast %cst_9 : f32 to vector<16x128xf32>
      %c0_10 = arith.constant 0 : index
      %c0_11 = arith.constant 0 : index
      %13 = vector.load %arg7[%c0_10, %c0_11] : memref<16x128xf32, #tpu.memory_space<vmem>>, vector<16x128xf32>
      tpu.vector_store %arg7[%c0_10, %c0_11], %12 {strides = array<i32>} : memref<16x128xf32, #tpu.memory_space<vmem>>, vector<16x128xf32>,
    } else {
    }
    %c0 = arith.constant 0 : index
    %c0_1 = arith.constant 0 : index
    %3 = vector.load %arg7[%c0, %c0_1] : memref<16x128xf32, #tpu.memory_space<vmem>>, vector<16x128xf32>
    %c0_2 = arith.constant 0 : index
    %c0_3 = arith.constant 0 : index
    %4 = vector.load %arg3[%c0_2, %c0_3] : memref<16x128xbf16, #tpu.memory_space<vmem>>, vector<16x128xbf16>
    %c0_4 = arith.constant 0 : index
    %c0_5 = arith.constant 0 : index
    %5 = vector.load %arg4[%c0_4, %c0_5] : memref<128x128xbf16, #tpu.memory_space<vmem>>, vector<128x128xbf16>
    %cst = arith.constant dense<0.000000e+00> : vector<16x128xf32>
    %6 = tpu.matmul %4, %5, %cst {dimension_numbers = #tpu.dot_dimension_numbers<[1], [1], [0], [0], [0, 0, 1, 0], [], []>} : vector<16x128xbf16>, vector<128x128xbf16>, vector<16x128xf32> -> vector<16x128xf32>
    %7 = arith.addf %3, %6 : vector<16x128xf32>
    %c0_6 = arith.constant 0 : index
    %c0_7 = arith.constant 0 : index
    %8 = vector.load %arg7[%c0_6, %c0_7] : memref<16x128xf32, #tpu.memory_space<vmem>>, vector<16x128xf32>
    tpu.vector_store %arg7[%c0_6, %c0_7], %7 {strides = array<i32>} : memref<16x128xf32, #tpu.memory_space<vmem>>, vector<16x128xf32>,
    %c1_i32 = arith.constant 1 : i32
    %9 = arith.cmpi eq, %arg2, %c1_i32 : i32
    %10 = arith.extui %9 : i1 to i32
    %c0_i32_8 = arith.constant 0 : i32
    %11 = arith.cmpi ne, %10, %c0_i32_8 : i32
    scf.if %11 {
      %c0_9 = arith.constant 0 : index
      %c0_10 = arith.constant 0 : index
      %12 = vector.load %arg7[%c0_9, %c0_10] : memref<16x128xf32, #tpu.memory_space<vmem>>, vector<16x128xf32>
      %c0_11 = arith.constant 0 : index
      %c0_12 = arith.constant 0 : index
      %13 = vector.load %arg5[%c0_11, %c0_12] : memref<1x128xf32, #tpu.memory_space<vmem>>, vector<1x128xf32>
      %14 = vector.broadcast %13 : vector<1x128xf32> to vector<16x128xf32>
      %15 = arith.addf %12, %14 : vector<16x128xf32>
      %c0_13 = arith.constant 0 : index
      %c0_14 = arith.constant 0 : index
      %16 = vector.load %arg6[%c0_13, %c0_14] : memref<16x128xf32, #tpu.memory_space<vmem>>, vector<16x128xf32>
      tpu.vector_store %arg6[%c0_13, %c0_14], %15 {strides = array<i32>} : memref<16x128xf32, #tpu.memory_space<vmem>>, vector<16x128xf32>,
    } else {
    }
    return
  }
  func.func @transform_0(%arg0: i32, %arg1: i32, %arg2: i32) -> (i32, i32) {
    %c0_i32 = arith.constant 0 : i32
    return %arg0, %arg2 : i32, i32
  }
  func.func @transform_1(%arg0: i32, %arg1: i32, %arg2: i32) -> (i32, i32) {
    %c0_i32 = arith.constant 0 : i32
    return %arg1, %arg2 : i32, i32
  }
  func.func @transform_2(%arg0: i32, %arg1: i32, %arg2: i32) -> (i32, i32) {
    %c0_i32 = arith.constant 0 : i32
    %c0_i32_0 = arith.constant 0 : i32
    return %c0_i32, %arg1 : i32, i32
  }
  func.func @transform_3(%arg0: i32, %arg1: i32, %arg2: i32) -> (i32, i32) {
    %c0_i32 = arith.constant 0 : i32
    return %arg0, %arg1 : i32, i32
  }
}

</mosaic_0001>

<llo_original>
// kernel: tpu_custom_call.1
$region0: #{tpu_custom_call.1}
  #allocation0 [shape = 'u32[]', space=smem, size = 0x4, offset = 0x4, fixed_abs, tag = 'smem constant byte address 0x4 - core index']
  #allocation1 [shape = 'u32[144,128]{1,0:T(1,128)}', space=vmem, size = 0x12000, scoped, tag = 'internal scratch']
  #allocation2 [shape = 'f32[16,128]{1,0:T(8,128)}', space=vmem, size = 0x2000, scoped, tag = 'scratch operand']
  %s0 = inlined_call_operand.hbm [shape: bf16[16,256], index: 0, kind: input, shape index: {}]
  %s1 = inlined_call_operand.hbm [shape: bf16[128,256], index: 1, kind: input, shape index: {}]
  %s2 = inlined_call_operand.vmem [shape: f32[1,128], index: 2, kind: input, shape index: {}]
  %s3 = inlined_call_operand.hbm [shape: f32[16,128], index: 3, kind: output, shape index: {}]
  %s4 = sld [smem:[#allocation0]]
  $region61: #{tpu_custom_call.1} parent=0
    _
  %s6 = ssub.s32 1, %s4
  %s7 = scalar_select 0, %s6, %s4
  $region1: #{tpu_custom_call.1} parent=0
    #allocation3 [shape = 'u8[8192]{0}', space=vmem, size = 0x2000, scoped, tag = 'input window, operand 0']
    #allocation4 [shape = 's32[2]{0}', space=sflag, size = 0x8, scoped, tag = 'scoped memory for tpu_custom_call.1']
    #allocation5 [shape = 's32[2]{0}', space=sflag, size = 0x8, scoped, tag = 'scoped memory for tpu_custom_call.1']
    #allocation6 [shape = 'u8[65536]{0}', space=vmem, size = 0x10000, scoped, tag = 'input window, operand 1']
    #allocation7 [shape = 's32[2]{0}', space=sflag, size = 0x8, scoped, tag = 'scoped memory for tpu_custom_call.1']
    #allocation8 [shape = 'u8[8192]{0}', space=vmem, size = 0x2000, scoped, tag = 'output window, operand 0, single buffered']
    %8 = vsyncpa [#allocation4], 0
    %s9 = scalar_lea.sflag [#allocation4], 1
    %10 = vsyncpa %s9, 0
    %11 = vsyncpa [#allocation7], 0
    %s12 = scalar_lea.sflag [#allocation7], 1
    %13 = vsyncpa %s12, 0
    %14 = vsyncpa [#allocation5], 0
    loop: start=0, step=1, limit=4
    $region2: #{tpu_custom_call.1} parent=1 // loop_pre_header
      _
    $region3: #{tpu_custom_call.1} parent=1 // loop_header
      %s16 = sphi 0, %s20
      %p17 = scmp.ge.s32.totalorder %s16, 4
      %s23 = sphi 0, %s42
      %s24 = sphi 0, %s38
      %s25 = sphi 0, %s34
      %s26 = sphi 0, %s23
      %s27 = sphi 0, %s24
      %s28 = sphi 0, %s25
      %s29 = sphi 0, %s26
      %s30 = sphi 0, %s27
      %s31 = sphi 0, %s28
      %s47 = sphi 0, %s49
      %s50 = sphi 0, %s47
      %s51 = sphi 0, %s50
      %s67 = sphi 0, %s51
      %s75 = sphi 0, %s77
      %s78 = sphi 0, %s75
      %s79 = sphi 0, %s78
      %s95 = sphi 0, %s79
      %s101 = sphi 0, %s103
      %s104 = sphi 0, %s101
      %s105 = sphi 0, %s104
      %s121 = sphi 0, %s105
      %s129 = sphi 0, %s131
      %s132 = sphi 0, %s129
      %s133 = sphi 0, %s132
      %s149 = sphi 0, %s133
    $region4: #{tpu_custom_call.1} parent=1 // loop_header_branch
      %19 = sbr.rel (%p17) target = $region8
    $region5: #{tpu_custom_call.1} parent=1 // loop_body
      %s21 = ssub.s32 %s16, 1
      %s22 = ssub.s32 %s16, 2
      %s32 = sadd.s32 1, %s25
      %p33 = scmp.ge.s32.totalorder %s32, 2
      %s34 = scalar_select %p33, 0, %s32
      %s35 = sadd.s32 1, %s24
      %s36 = scalar_select %p33, %s35, %s24
      %p37 = scmp.ge.s32.totalorder %s36, 1
      %s38 = scalar_select %p37, 0, %s36
      %s39 = sadd.s32 1, %s23
      %s40 = scalar_select %p37, %s39, %s23
      %p41 = scmp.ge.s32.totalorder %s40, 1
      %s42 = scalar_select %p41, 0, %s40
      %s43 = ssub.s32 %s23, %s42
      %s44 = ssub.s32 %s25, %s34
      %s45 = sor.u32 %s43, %s44
      %p46 = scmp.eq.s32.totalorder %s45, 0
      %s48 = sadd.s32 %s47, 1
      %s49 = scalar_select %p46, %s47, %s48
      %p52 = pneg %p46
      %p53 = scmp.eq.s32.totalorder %s16, 1
      %p54 = por %p52, %p53
      %p55 = scmp.ne.s32.totalorder %s47, %s50
      %p56 = scmp.eq.s32.totalorder %s16, 0
      %p57 = por %p55, %p56
      %p58 = scmp.ne.s32.totalorder %s47, %s50
      %p59 = scmp.eq.s32.totalorder %s21, 1
      %p60 = por %p58, %p59
      %p61 = scmp.ne.s32.totalorder %s50, %s51
      %p62 = scmp.eq.s32.totalorder %s21, 0
      %p63 = por %p61, %p62
      %p64 = scmp.ne.s32.totalorder %s50, %s51
      %p65 = scmp.eq.s32.totalorder %s22, 1
      %p66 = por %p64, %p65
      %p68 = scmp.ne.s32.totalorder %s51, %s67
      %p69 = scmp.eq.s32.totalorder %s22, 0
      %p70 = por %p68, %p69
      %s71 = ssub.s32 %s24, %s38
      %s72 = ssub.s32 %s25, %s34
      %s73 = sor.u32 %s71, %s72
      %p74 = scmp.eq.s32.totalorder %s73, 0
      %s76 = sadd.s32 %s75, 1
      %s77 = scalar_select %p74, %s75, %s76
      %p80 = pneg %p74
      %p81 = scmp.eq.s32.totalorder %s16, 1
      %p82 = por %p80, %p81
      %p83 = scmp.ne.s32.totalorder %s75, %s78
      %p84 = scmp.eq.s32.totalorder %s16, 0
      %p85 = por %p83, %p84
      %p86 = scmp.ne.s32.totalorder %s75, %s78
      %p87 = scmp.eq.s32.totalorder %s21, 1
      %p88 = por %p86, %p87
      %p89 = scmp.ne.s32.totalorder %s78, %s79
      %p90 = scmp.eq.s32.totalorder %s21, 0
      %p91 = por %p89, %p90
      %p92 = scmp.ne.s32.totalorder %s78, %s79
      %p93 = scmp.eq.s32.totalorder %s22, 1
      %p94 = por %p92, %p93
      %p96 = scmp.ne.s32.totalorder %s79, %s95
      %p97 = scmp.eq.s32.totalorder %s22, 0
      %p98 = por %p96, %p97
      %s99 = ssub.s32 %s24, %s38
      %p100 = scmp.eq.s32.totalorder %s99, 0
      %s102 = sadd.s32 %s101, 1
      %s103 = scalar_select %p100, %s101, %s102
      %p106 = pneg %p100
      %p107 = scmp.eq.s32.totalorder %s16, 1
      %p108 = por %p106, %p107
      %p109 = scmp.ne.s32.totalorder %s101, %s104
      %p110 = scmp.eq.s32.totalorder %s16, 0
      %p111 = por %p109, %p110
      %p112 = scmp.ne.s32.totalorder %s101, %s104
      %p113 = scmp.eq.s32.totalorder %s21, 1
      %p114 = por %p112, %p113
      %p115 = scmp.ne.s32.totalorder %s104, %s105
      %p116 = scmp.eq.s32.totalorder %s21, 0
      %p117 = por %p115, %p116
      %p118 = scmp.ne.s32.totalorder %s104, %s105
      %p119 = scmp.eq.s32.totalorder %s22, 1
      %p120 = por %p118, %p119
      %p122 = scmp.ne.s32.totalorder %s105, %s121
      %p123 = scmp.eq.s32.totalorder %s22, 0
      %p124 = por %p122, %p123
      %s125 = ssub.s32 %s23, %s42
      %s126 = ssub.s32 %s24, %s38
      %s127 = sor.u32 %s125, %s126
      %p128 = scmp.eq.s32.totalorder %s127, 0
      %s130 = sadd.s32 %s129, 1
      %s131 = scalar_select %p128, %s129, %s130
      %p134 = pneg %p128
      %p135 = scmp.eq.s32.totalorder %s16, 1
      %p136 = por %p134, %p135
      %p137 = scmp.ne.s32.totalorder %s129, %s132
      %p138 = scmp.eq.s32.totalorder %s16, 0
      %p139 = por %p137, %p138
      %p140 = scmp.ne.s32.totalorder %s129, %s132
      %p141 = scmp.eq.s32.totalorder %s21, 1
      %p142 = por %p140, %p141
      %p143 = scmp.ne.s32.totalorder %s132, %s133
      %p144 = scmp.eq.s32.totalorder %s21, 0
      %p145 = por %p143, %p144
      %p146 = scmp.ne.s32.totalorder %s132, %s133
      %p147 = scmp.eq.s32.totalorder %s22, 1
      %p148 = por %p146, %p147
      %p150 = scmp.ne.s32.totalorder %s133, %s149
      %p151 = scmp.eq.s32.totalorder %s22, 0
      %p152 = por %p150, %p151
      %p153 = scmp.le.s32.totalorder 1, %s16
      %p154 = scmp.lt.s32.totalorder %s16, 3
      %p155 = pnand %p153, %p154
      %p156 = pneg %p155
      // Predicated region
      $region9: #{tpu_custom_call.1} parent=5 // pred_check
        _
      $region10: #{tpu_custom_call.1} parent=5 // pred_check_branch
        %158 = sbr.rel (%p155) target = $region12
      $region11: #{tpu_custom_call.1} parent=5 // pred_region
        %s159 = ssub.s32 %s16, 1
        // Predicated region
        $region13: #{tpu_custom_call.1} parent=11 // pred_check
          %p160 = pneg %p117
        $region14: #{tpu_custom_call.1} parent=11 // pred_check_branch
          %162 = sbr.rel (%p160) target = $region16
        $region15: #{tpu_custom_call.1} parent=11 // pred_region
          %p163 = scmp.lt.s32.totalorder %s27, 0
          %s164 = scalar_select %p163, %s27, 0
          %s165 = scalar_lea.vmem %s2, %s164
        $region16: #{tpu_custom_call.1} parent=11 // pred_fallthru
          _
      $region12: #{tpu_custom_call.1} parent=5 // pred_fallthru
        _
      %p166 = scmp.lt.s32.totalorder %s16, 2
      // Predicated region
      $region17: #{tpu_custom_call.1} parent=5 // pred_check
        %p167 = pneg %p166
      $region18: #{tpu_custom_call.1} parent=5 // pred_check_branch
        %169 = sbr.rel (%p167) target = $region20
      $region19: #{tpu_custom_call.1} parent=5 // pred_region
        // Predicated region
        $region21: #{tpu_custom_call.1} parent=19 // pred_check
          %p170 = pneg %p57
        $region22: #{tpu_custom_call.1} parent=19 // pred_check_branch
          %172 = sbr.rel (%p170) target = $region24
        $region23: #{tpu_custom_call.1} parent=19 // pred_region
          %s173 = sand.u32 %s47, 1
          %s174 = scalar_lea.sflag [#allocation4], %s173
          %s175 = sand.u32 %s47, 1
          %s176 = smul.addr %s175, 8
          %s177 = scalar_lea.vmem [#allocation3], %s176
          %s178 = smul.u32 2, %s23
          %s180 = ssub.s32 128, 128
          %181 = vsyncadd %s174, %s180
          %s182 = smul.addr %s178, 2
          %s183 = sadd.s32 %s25, %s182
          %s184 = smul.addr %s183, 64
          %s185 = scalar_lea.hbm %s0, %s184
          %s186 = sshll.u32 %s177, 4
          %s187 = int_to_ptr.vmem [resolvable:$true] %s186
          %192 = dma.hbm_to_vmem [thread:$0]  %s185, 128, %s187, %s174, 128, 64, 4
        $region24: #{tpu_custom_call.1} parent=19 // pred_fallthru
          _
        // Predicated region
        $region25: #{tpu_custom_call.1} parent=19 // pred_check
          %p193 = pneg %p85
        $region26: #{tpu_custom_call.1} parent=19 // pred_check_branch
          %195 = sbr.rel (%p193) target = $region28
        $region27: #{tpu_custom_call.1} parent=19 // pred_region
          %s196 = sand.u32 %s75, 1
          %s197 = scalar_lea.sflag [#allocation7], %s196
          %s198 = sand.u32 %s75, 1
          %s199 = smul.addr %s198, 64
          %s200 = scalar_lea.vmem [#allocation6], %s199
          %s201 = smul.u32 16, %s24
          %s203 = ssub.s32 1024, 1024
          %204 = vsyncadd %s197, %s203
          %s205 = smul.addr %s201, 2
          %s206 = sadd.s32 %s25, %s205
          %s207 = smul.addr %s206, 64
          %s208 = scalar_lea.hbm %s1, %s207
          %s209 = sshll.u32 %s200, 4
          %s210 = int_to_ptr.vmem [resolvable:$true] %s209
          %215 = dma.hbm_to_vmem [thread:$0]  %s208, 1024, %s210, %s197, 128, 64, 4
        $region28: #{tpu_custom_call.1} parent=19 // pred_fallthru
          _
      $region20: #{tpu_custom_call.1} parent=5 // pred_fallthru
        _
      %p216 = scmp.le.s32.totalorder 1, %s16
      %p217 = scmp.lt.s32.totalorder %s16, 3
      %p218 = pnand %p216, %p217
      %p219 = pneg %p218
      // Predicated region
      $region29: #{tpu_custom_call.1} parent=5 // pred_check
        _
      $region30: #{tpu_custom_call.1} parent=5 // pred_check_branch
        %221 = sbr.rel (%p218) target = $region32
      $region31: #{tpu_custom_call.1} parent=5 // pred_region
        %s222 = ssub.s32 %s16, 1
        %s223 = sand.u32 %s50, 1
        %s224 = scalar_lea.sflag [#allocation4], %s223
        %s225 = sand.u32 %s50, 1
        %s226 = smul.addr %s225, 8
        %s227 = scalar_lea.vmem [#allocation3], %s226
        // Predicated region
        $region33: #{tpu_custom_call.1} parent=31 // pred_check
          %p228 = pneg %p63
        $region34: #{tpu_custom_call.1} parent=31 // pred_check_branch
          %230 = sbr.rel (%p228) target = $region36
        $region35: #{tpu_custom_call.1} parent=31 // pred_region
          %231 = dma.done %s224, 128
        $region36: #{tpu_custom_call.1} parent=31 // pred_fallthru
          _
        %s232 = sand.u32 %s78, 1
        %s233 = scalar_lea.sflag [#allocation7], %s232
        %s234 = sand.u32 %s78, 1
        %s235 = smul.addr %s234, 64
        %s236 = scalar_lea.vmem [#allocation6], %s235
        // Predicated region
        $region37: #{tpu_custom_call.1} parent=31 // pred_check
          %p237 = pneg %p91
        $region38: #{tpu_custom_call.1} parent=31 // pred_check_branch
          %239 = sbr.rel (%p237) target = $region40
        $region39: #{tpu_custom_call.1} parent=31 // pred_region
          %240 = dma.done %s233, 1024
        $region40: #{tpu_custom_call.1} parent=31 // pred_fallthru
          _
        %s241 = sand.u32 %s50, 1
        %s242 = scalar_lea.sflag [#allocation4], %s241
        %s243 = sand.u32 %s50, 1
        %s244 = smul.addr %s243, 8
        %s245 = scalar_lea.vmem [#allocation3], %s244
        %p246 = pneg %p63
        %p247 = pneg %p60
        %s248 = sand.u32 %s78, 1
        %s249 = scalar_lea.sflag [#allocation7], %s248
        %s250 = sand.u32 %s78, 1
        %s251 = smul.addr %s250, 64
        %s252 = scalar_lea.vmem [#allocation6], %s251
        %p253 = pneg %p91
        %p254 = pneg %p88
        %p255 = scmp.lt.s32.totalorder %s27, 0
        %s256 = scalar_select %p255, %s27, 0
        %s257 = scalar_lea.vmem %s2, %s256
        %p258 = pneg %p117
        %p259 = pneg %p114
        %p260 = pneg %p145
        %p261 = pneg %p142
        %s262 = smul.u32 2, %s26
        %s263 = smul.u32 16, %s27
        %p264 = scmp.lt.s32.totalorder %s27, 0
        %s265 = scalar_select %p264, %s27, 0
        %s266 = scalar_lea.vmem %s2, %s265
        %s267 = smul.u32 2, %s26
        %p269 = scmp.eq.s32.totalorder %s28, 0
        // Predicated region
        $region41: #{tpu_custom_call.1} parent=31 // pred_check
          %p270 = pneg %p269
        $region42: #{tpu_custom_call.1} parent=31 // pred_check_branch
          %272 = sbr.rel (%p270) target = $region44
        $region43: #{tpu_custom_call.1} parent=31 // pred_region
          %273 = vst [vmem:[#allocation2] sm:$0xff] 0.0
          %274 = vst [vmem:[#allocation2 + $0x8] sm:$0xff] 0.0
        $region44: #{tpu_custom_call.1} parent=31 // pred_fallthru
          _
        %v275 = vld [vmem:[#allocation2] sm:$0xff]
        %v276 = vld [vmem:[#allocation2 + $0x8] sm:$0xff]
        %v277 = vld [vmem:[%s227] sm:$0xf]
        %v278 = vld [vmem:[%s227 + $0x4] sm:$0xf]
        %v279 = vld [vmem:[%s236] sm:$0xf]
        %v280 = vld [vmem:[%s236 + $0x4] sm:$0xf]
        %v281 = vld [vmem:[%s236 + $0x8] sm:$0xf]
        %v282 = vld [vmem:[%s236 + $0xc] sm:$0xf]
        %v283 = vld [vmem:[%s236 + $0x10] sm:$0xf]
        %v284 = vld [vmem:[%s236 + $0x14] sm:$0xf]
        %v285 = vld [vmem:[%s236 + $0x18] sm:$0xf]
        %v286 = vld [vmem:[%s236 + $0x1c] sm:$0xf]
        %v287 = vld [vmem:[%s236 + $0x20] sm:$0xf]
        %v288 = vld [vmem:[%s236 + $0x24] sm:$0xf]
        %v289 = vld [vmem:[%s236 + $0x28] sm:$0xf]
        %v290 = vld [vmem:[%s236 + $0x2c] sm:$0xf]
        %v291 = vld [vmem:[%s236 + $0x30] sm:$0xf]
        %v292 = vld [vmem:[%s236 + $0x34] sm:$0xf]
        %v293 = vld [vmem:[%s236 + $0x38] sm:$0xf]
        %v294 = vld [vmem:[%s236 + $0x3c] sm:$0xf]
        %v297 = vunpack.c.l.b16 %v277
        %v298 = vunpack.c.l.b16 %v278
        %v299 = vpack.c.b16 %v298, %v297
        %v317 = vunpack.c.l.b16 %v279
        %v318 = vunpack.c.l.b16 %v280
        %v319 = vunpack.c.l.b16 %v281
        %v320 = vunpack.c.l.b16 %v282
        %v321 = vunpack.c.l.b16 %v283
        %v322 = vunpack.c.l.b16 %v284
        %v323 = vunpack.c.l.b16 %v285
        %v324 = vunpack.c.l.b16 %v286
        %v325 = vunpack.c.l.b16 %v287
        %v326 = vunpack.c.l.b16 %v288
        %v327 = vunpack.c.l.b16 %v289
        %v328 = vunpack.c.l.b16 %v290
        %v329 = vunpack.c.l.b16 %v291
        %v330 = vunpack.c.l.b16 %v292
        %v331 = vunpack.c.l.b16 %v293
        %v332 = vunpack.c.l.b16 %v294
        %v333 = vpack.c.b16 %v318, %v317
        %v334 = vpack.c.b16 %v320, %v319
        %v335 = vpack.c.b16 %v322, %v321
        %v336 = vpack.c.b16 %v324, %v323
        %v337 = vpack.c.b16 %v326, %v325
        %v338 = vpack.c.b16 %v328, %v327
        %v339 = vpack.c.b16 %v330, %v329
        %v340 = vpack.c.b16 %v332, %v331
        %349 = vmatprep.subr.bf16.mxu0 0
        %350 = vmatpush1.bf16.xpose.msra.mxu0 %v340
        %351 = vmatprep.subr.bf16.mxu0 0
        %352 = vmatpush1.bf16.xpose.msra.mxu0 %v339
        %353 = vmatprep.subr.bf16.mxu0 0
        %354 = vmatpush1.bf16.xpose.msra.mxu0 %v338
        %355 = vmatprep.subr.bf16.mxu0 0
        %356 = vmatpush1.bf16.xpose.msra.mxu0 %v337
        %357 = vmatprep.subr.bf16.mxu0 0
        %358 = vmatpush1.bf16.xpose.msra.mxu0 %v336
        %359 = vmatprep.subr.bf16.mxu0 0
        %360 = vmatpush1.bf16.xpose.msra.mxu0 %v335
        %361 = vmatprep.subr.bf16.mxu0 0
        %362 = vmatpush1.bf16.xpose.msra.mxu0 %v334
        %363 = vmatprep.subr.bf16.mxu0 0
        %364 = vmatpush1.bf16.xpose.msra.mxu0 %v333
        %365 = vmatprep.subr.bf16.mxu0 0
        %366 = vmatpush2.bf16.xpose.msra.mxu0 0
        %367 = vmatprep.subr.bf16.mxu0 0
        %368 = vmatpush2.bf16.xpose.msra.mxu0 0
        %369 = vmatprep.subr.bf16.mxu0 0
        %370 = vmatpush2.bf16.xpose.msra.mxu0 0
        %371 = vmatprep.subr.bf16.mxu0 0
        %372 = vmatpush2.bf16.xpose.msra.mxu0 0
        %373 = vmatprep.subr.bf16.mxu0 0
        %374 = vmatpush2.bf16.xpose.msra.mxu0 0
        %375 = vmatprep.subr.bf16.mxu0 0
        %376 = vmatpush2.bf16.xpose.msra.mxu0 0
        %377 = vmatprep.subr.bf16.mxu0 0
        %378 = vmatpush2.bf16.xpose.msra.mxu0 0
        %379 = vmatprep.subr.bf16.mxu0 0
        %380 = vmatpush2.bf16.xpose.msra.mxu0 0
        %381 = vmatprep.mubr.bf16.mxu0 0
        %382 = vmatmul.mubr.bf16.gmra.mxu0 %v299
        %v383 = vpop.f32.mrf.mxu0
        %v384 = vadd.f32 0.0, %v383
        %v385 = vpop.f32.mrf.mxu0
        %v386 = vpop.f32.mrf.mxu0
        %v387 = vadd.f32 0.0, %v386
        %v388 = vpop.f32.mrf.mxu0
        %389 = vdwg.mxu0
        %v390 = vadd.f32 %v275, %v384
        %v391 = vadd.f32 %v276, %v387
        %392 = vst [vmem:[#allocation2] sm:$0xff] %v390
        %393 = vst [vmem:[#allocation2 + $0x8] sm:$0xff] %v391
        %p394 = scmp.eq.s32.totalorder %s28, 1
        // Predicated region
        $region45: #{tpu_custom_call.1} parent=31 // pred_check
          %p395 = pneg %p394
        $region46: #{tpu_custom_call.1} parent=31 // pred_check_branch
          %397 = sbr.rel (%p395) target = $region48
        $region47: #{tpu_custom_call.1} parent=31 // pred_region
          %v398 = vld [vmem:[#allocation2] sm:$0xff]
          %v399 = vld [vmem:[#allocation2 + $0x8] sm:$0xff]
          %v400 = vld [vmem:[%s266] sm:$0x1]
          %v402 = vlaneseq
          %v403 = vshrl.u32 %v402, 7
          %v404 = vsub.s32 0, %v403
          %v405 = vrot.slane %v400, %v404
          %v407 = vadd.f32 %v398, %v405
          %v408 = vadd.f32 %v399, %v405
          %409 = vst [vmem:[#allocation8] sm:$0xff] %v407
          %410 = vst [vmem:[#allocation8 + $0x8] sm:$0xff] %v408
        $region48: #{tpu_custom_call.1} parent=31 // pred_fallthru
          _
        // Predicated region
        $region49: #{tpu_custom_call.1} parent=31 // pred_check
          %p411 = pneg %p142
        $region50: #{tpu_custom_call.1} parent=31 // pred_check_branch
          %413 = sbr.rel (%p411) target = $region52
        $region51: #{tpu_custom_call.1} parent=31 // pred_region
          %s414 = smul.u32 2, %s26
          %s416 = ssub.s32 256, 256
          %417 = vsyncadd [#allocation5], %s416
          %s418 = sadd.s32 %s27, %s414
          %s419 = smul.addr %s418, 128
          %s420 = scalar_lea.hbm %s3, %s419
          %s421 = sshll.u32 [#allocation8], 4
          %s422 = int_to_ptr.vmem [resolvable:$true] %s421
          %427 = dma.vmem_to_hbm [thread:$0]  %s422, 256, %s420, [#allocation5], 128, 128, 8
        $region52: #{tpu_custom_call.1} parent=31 // pred_fallthru
          _
        // Predicated region
        $region53: #{tpu_custom_call.1} parent=31 // pred_check
          %p428 = pneg %p142
        $region54: #{tpu_custom_call.1} parent=31 // pred_check_branch
          %430 = sbr.rel (%p428) target = $region56
        $region55: #{tpu_custom_call.1} parent=31 // pred_region
          %431 = dma.done [#allocation5], 256
        $region56: #{tpu_custom_call.1} parent=31 // pred_fallthru
          _
      $region32: #{tpu_custom_call.1} parent=5 // pred_fallthru
        _
      %p432 = scmp.le.s32.totalorder 2, %s16
      // Predicated region
      $region57: #{tpu_custom_call.1} parent=5 // pred_check
        %p433 = pneg %p432
      $region58: #{tpu_custom_call.1} parent=5 // pred_check_branch
        %435 = sbr.rel (%p433) target = $region60
      $region59: #{tpu_custom_call.1} parent=5 // pred_region
        %s436 = ssub.s32 %s16, 2
      $region60: #{tpu_custom_call.1} parent=5 // pred_fallthru
        _
    $region6: #{tpu_custom_call.1} parent=1 // loop_footer
      %s20 = sadd.s32 1, %s16
    $region7: #{tpu_custom_call.1} parent=1 // loop_footer_branch
      %15 = sbr.rel target = $region3
    $region8: #{tpu_custom_call.1} parent=1 // loop_exit
      _
    %437 = vsyncpa [#allocation4], 1
    %s438 = scalar_lea.sflag [#allocation4], 1
    %439 = vsyncpa %s438, 1
    %440 = vsyncpa [#allocation7], 1
    %s441 = scalar_lea.sflag [#allocation7], 1
    %442 = vsyncpa %s441, 1
    %443 = vsyncpa [#allocation5], 1
    %s444 = scalar_lea.sflag [#allocation5], 1
    %445 = vsyncpa %s444, 1

</llo_original>
